<compile_context>
chip_gen: v5e
topology: v5e:2x2
jax: 0.10.0
libtpu: 0.0.40
codegen_flags: <defaults>
</compile_context>

<pallas_src>
import jax
import jax.numpy as jnp
from jax.experimental import pallas as pl
from jax.experimental.pallas import tpu as pltpu


def _round_up(x, m):
    return ((x + m - 1) // m) * m


def _vmem_capacity_bytes():
    try:
        info = pltpu.get_tpu_info()
        return int(getattr(info, "vmem_capacity_bytes", 64 * 1024 * 1024))
    except Exception:
        return 64 * 1024 * 1024  # conservative: fits v5e / v6e / v7x


def _pad_last2(a, rows, cols):
    r, c = a.shape[-2], a.shape[-1]
    if r == rows and c == cols:
        return a
    pad = [(0, 0)] * (a.ndim - 2) + [(0, rows - r), (0, cols - c)]
    return jnp.pad(a, pad)


def _sampled_linear_kernel(x_ref, wmu_ref, wsig_ref, weps_ref,
                           bmu_ref, bsig_ref, beps_ref, o_ref, w_scr):
    i = pl.program_id(2)  # row-tile axis (innermost, sequential)

    # Sample the weight tile once per (sample, out_tile); it stays cached in
    # VMEM scratch (in matmul dtype) while we sweep the n_data row tiles.
    @pl.when(i == 0)
    def _():
        w = (wmu_ref[...].astype(jnp.float32)
             + wsig_ref[...].astype(jnp.float32)
             * weps_ref[0].astype(jnp.float32))
        w_scr[...] = w.astype(w_scr.dtype)

    acc = jnp.dot(x_ref[...], w_scr[...], preferred_element_type=jnp.float32)
    b = (bmu_ref[...].astype(jnp.float32)
         + bsig_ref[...].astype(jnp.float32)
         * beps_ref[0].astype(jnp.float32))          # (1, tn), broadcast over rows
    o_ref[0] = (acc + b).astype(o_ref.dtype)


def bayesian_linear_forward(x, weight_mu, weight_rho, bias_mu, bias_rho, key,
                            n_samples=1, *, matmul_dtype=jnp.bfloat16,
                            tm_target=256, tn_target=512, fold_threshold=128):
    """x: (n_data, in_f) -> (n_samples, n_data, out_f)."""
    n_data, in_f = x.shape
    out_f = weight_mu.shape[0]
    out_dtype = x.dtype

    mm_dtype = jnp.dtype(matmul_dtype) if matmul_dtype is not None else jnp.dtype(x.dtype)
    mm_bytes = mm_dtype.itemsize
    out_bytes = jnp.dtype(out_dtype).itemsize
    sub_align = 16 if mm_bytes < 4 else 8

    # Hoisted, numerically stable softplus; (in_f, out_f) layout so the kernel
    # runs a plain x @ w on the MXU (no per-sample transpose).
    w_mu_t = weight_mu.T.astype(jnp.float32)
    w_sigma_t = jax.nn.softplus(weight_rho.astype(jnp.float32)).T
    b_mu = bias_mu.reshape(1, out_f).astype(jnp.float32)
    b_sigma = jax.nn.softplus(bias_rho.astype(jnp.float32)).reshape(1, out_f)

    # eps drawn directly in the (in_f, out_f) layout used in-kernel
    # (statistically identical to drawing (out_f, in_f) and transposing).
    k_w, k_b = jax.random.split(key)
    w_eps = jax.random.normal(k_w, (n_samples, in_f, out_f), jnp.float32)
    b_eps = jax.random.normal(k_b, (n_samples, 1, out_f), jnp.float32)

    # Small layers: fold samples into the lane dim -> lane-dense output and a
    # wide MXU N dimension (single (n_data, n_samples*out_f) matmul).
    fold = (out_f < fold_threshold) and (n_samples > 1)
    if fold:
        ns_eff, of_eff = 1, n_samples * out_f
        w_mu_e = jnp.tile(w_mu_t, (1, n_samples))
        w_sig_e = jnp.tile(w_sigma_t, (1, n_samples))
        w_eps_e = w_eps.transpose(1, 0, 2).reshape(1, in_f, of_eff)
        b_mu_e = jnp.tile(b_mu, (1, n_samples))
        b_sig_e = jnp.tile(b_sigma, (1, n_samples))
        b_eps_e = b_eps.reshape(1, 1, of_eff)
    else:
        ns_eff, of_eff = n_samples, out_f
        w_mu_e, w_sig_e, w_eps_e = w_mu_t, w_sigma_t, w_eps
        b_mu_e, b_sig_e, b_eps_e = b_mu, b_sigma, b_eps

    # Wrapper-side padding to aligned multiples (never the full-extent fallback).
    in_f_p = _round_up(in_f, 128)
    of_p = _round_up(of_eff, 128)

    # Generation-aware VMEM budget (~48 MiB on v7x, ~96 MiB on v5e/v6e).
    vmem_cap = _vmem_capacity_bytes()
    budget = (vmem_cap * 3) // 4

    tn = max(128, min((tn_target // 128) * 128, of_p))
    while of_p % tn:
        tn -= 128
    tm = _round_up(min(tm_target, _round_up(n_data, sub_align)), sub_align)

    def _footprint(tm_, tn_):
        return (2 * tm_ * in_f_p * mm_bytes          # x blocks (double-buffered)
                + 3 * 2 * in_f_p * tn_ * mm_bytes    # mu / sigma / eps blocks
                + in_f_p * tn_ * mm_bytes            # sampled-weight scratch
                + 2 * tm_ * tn_ * out_bytes          # output blocks
                + 3 * 2 * 8 * tn_ * 4)               # bias blocks (sublane padded)

    while _footprint(tm, tn) > budget and tn > 128:
        tn -= 128
        while of_p % tn:
            tn -= 128
    while _footprint(tm, tn) > budget and tm > sub_align:
        tm = _round_up(max(sub_align, tm // 2), sub_align)

    nd_p = _round_up(n_data, tm)

    # Cast matmul-side operands at the wrapper boundary (bf16 storage halves the
    # HBM bytes); bias streams stay f32 (tiny).
    x_p = _pad_last2(x, nd_p, in_f_p).astype(mm_dtype)
    w_mu_p = _pad_last2(w_mu_e, in_f_p, of_p).astype(mm_dtype)
    w_sig_p = _pad_last2(w_sig_e, in_f_p, of_p).astype(mm_dtype)
    w_eps_p = _pad_last2(w_eps_e, in_f_p, of_p).astype(mm_dtype)
    b_mu_p = _pad_last2(b_mu_e, 1, of_p)
    b_sig_p = _pad_last2(b_sig_e, 1, of_p)
    b_eps_p = _pad_last2(b_eps_e, 1, of_p)

    grid = (ns_eff, of_p // tn, nd_p // tm)  # row-tile axis innermost
    vmem_limit = int(min(vmem_cap, max(2 * _footprint(tm, tn), 32 * 1024 * 1024)))

    out_p = pl.pallas_call(
        _sampled_linear_kernel,
        out_shape=jax.ShapeDtypeStruct((ns_eff, nd_p, of_p), out_dtype),
        grid_spec=pltpu.PrefetchScalarGridSpec(
            num_scalar_prefetch=0,
            grid=grid,
            in_specs=[
                pl.BlockSpec((tm, in_f_p), lambda s, j, i: (i, 0)),        # x
                pl.BlockSpec((in_f_p, tn), lambda s, j, i: (0, j)),        # w_mu
                pl.BlockSpec((in_f_p, tn), lambda s, j, i: (0, j)),        # w_sigma
                pl.BlockSpec((1, in_f_p, tn), lambda s, j, i: (s, 0, j)),  # w_eps[s]
                pl.BlockSpec((1, tn), lambda s, j, i: (0, j)),             # bias_mu
                pl.BlockSpec((1, tn), lambda s, j, i: (0, j)),             # bias_sigma
                pl.BlockSpec((1, 1, tn), lambda s, j, i: (s, 0, j)),       # b_eps[s]
            ],
            out_specs=pl.BlockSpec((1, tm, tn), lambda s, j, i: (s, i, j)),
            scratch_shapes=[pltpu.VMEM((in_f_p, tn), mm_dtype)],
        ),
        compiler_params=pltpu.CompilerParams(
            dimension_semantics=("parallel", "parallel", "arbitrary"),
            vmem_limit_bytes=vmem_limit),
    )(x_p, w_mu_p, w_sig_p, w_eps_p, b_mu_p, b_sig_p, b_eps_p)

    if fold:
        out = out_p[0, :n_data, :n_samples * out_f]
        out = out.reshape(n_data, n_samples, out_f).transpose(1, 0, 2)
    else:
        out = out_p[:, :n_data, :out_f]
    return out


def _reference(x, weight_mu, weight_rho, bias_mu, bias_rho, key, n_samples):
    """Pure-JAX reference using the SAME eps draws/layout as the wrapper."""
    in_f = x.shape[-1]
    out_f = weight_mu.shape[0]
    k_w, k_b = jax.random.split(key)
    w_eps = jax.random.normal(k_w, (n_samples, in_f, out_f), jnp.float32)
    b_eps = jax.random.normal(k_b, (n_samples, 1, out_f), jnp.float32)
    w_t = weight_mu.T[None] + jax.nn.softplus(weight_rho).T[None] * w_eps
    b = (bias_mu.reshape(1, 1, out_f)
         + jax.nn.softplus(bias_rho).reshape(1, 1, out_f) * b_eps)
    return jnp.einsum('nd,sdo->sno', x, w_t) + b


if __name__ == "__main__":
    key = jax.random.PRNGKey(0)
    rho_scale = -3.0  # config.rho_scale

    def make_layer(k, in_f, out_f):
        # config.mu_scale is None -> xavier_uniform init for weight_mu.
        limit = (6.0 / (in_f + out_f)) ** 0.5
        weight_mu = jax.random.uniform(k, (out_f, in_f), jnp.float32, -limit, limit)
        weight_rho = jnp.full((out_f, in_f), rho_scale, jnp.float32)
        bias_mu = jnp.zeros((1, out_f), jnp.float32)
        bias_rho = jnp.full((1, out_f), rho_scale, jnp.float32)
        return weight_mu, weight_rho, bias_mu, bias_rho

    ok = True

    # Case 1: small layer -> samples folded into the lane dimension.
    k0, k1, k2 = jax.random.split(key, 3)
    in_f, out_f, n_data, n_samples = 32, 32, 8, 2
    weight_mu, weight_rho, bias_mu, bias_rho = make_layer(k0, in_f, out_f)
    x = jax.random.normal(k1, (n_data, in_f), jnp.float32)
    out = bayesian_linear_forward(x, weight_mu, weight_rho, bias_mu, bias_rho,
                                  k2, n_samples=n_samples)
    out = jax.block_until_ready(out)
    ref = _reference(x, weight_mu, weight_rho, bias_mu, bias_rho, k2, n_samples)
    ok &= (out.shape == (n_samples, n_data, out_f))
    ok &= bool(jnp.allclose(out, ref, atol=3e-2, rtol=3e-2))  # bf16 operands

    # Case 2: larger layer -> sample grid axis, weight resident across row tiles.
    k3, k4, k5 = jax.random.split(k2, 3)
    in_f, out_f, n_data, n_samples = 128, 256, 384, 2
    weight_mu, weight_rho, bias_mu, bias_rho = make_layer(k3, in_f, out_f)
    x = jax.random.normal(k4, (n_data, in_f), jnp.float32)
    out = bayesian_linear_forward(x, weight_mu, weight_rho, bias_mu, bias_rho,
                                  k5, n_samples=n_samples, tm_target=128)
    out = jax.block_until_ready(out)
    ref = _reference(x, weight_mu, weight_rho, bias_mu, bias_rho, k5, n_samples)
    ok &= (out.shape == (n_samples, n_data, out_f))
    ok &= bool(jnp.allclose(out, ref, atol=3e-2, rtol=3e-2))

    if ok:
        print("KERNEL_OK")
    else:
        print("KERNEL_MISMATCH")
</pallas_src>

<mosaic_0001>
module attributes {stable_mosaic.version = 11 : i64} {
  func.func @_sampled_linear_kernel(%arg0: i32, %arg1: i32, %arg2: i32, %arg3: memref<16x128xbf16, #tpu.memory_space<vmem>>, %arg4: memref<128x128xbf16, #tpu.memory_space<vmem>>, %arg5: memref<128x128xbf16, #tpu.memory_space<vmem>>, %arg6: memref<1x128x128xbf16, #tpu.memory_space<vmem>>, %arg7: memref<1x128xf32, #tpu.memory_space<vmem>>, %arg8: memref<1x128xf32, #tpu.memory_space<vmem>>, %arg9: memref<1x1x128xf32, #tpu.memory_space<vmem>>, %arg10: memref<1x16x128xf32, #tpu.memory_space<vmem>>, %arg11: memref<128x128xbf16, #tpu.memory_space<vmem>>) attributes {dimension_semantics = [#tpu.dimension_semantics<parallel>, #tpu.dimension_semantics<parallel>, #tpu.dimension_semantics<arbitrary>], iteration_bounds = array<i64: 1, 1, 1>, scalar_prefetch = 0 : i64, scratch_operands = 1 : i64, tpu.core_type = #tpu.core_type<tc>, window_params = [{transform_indices = @transform_0, window_bounds = array<i64: 16, 128>}, {transform_indices = @transform_1, window_bounds = array<i64: 128, 128>}, {transform_indices = @transform_2, window_bounds = array<i64: 128, 128>}, {transform_indices = @transform_3, window_bounds = array<i64: 1, 128, 128>}, {transform_indices = @transform_4, window_bounds = array<i64: 1, 128>}, {transform_indices = @transform_5, window_bounds = array<i64: 1, 128>}, {transform_indices = @transform_6, window_bounds = array<i64: 1, 1, 128>}, {transform_indices = @transform_7, window_bounds = array<i64: 1, 16, 128>}]} {
    %c0_i32 = arith.constant 0 : i32
    %0 = arith.cmpi eq, %arg2, %c0_i32 : i32
    %1 = arith.extui %0 : i1 to i32
    %c0_i32_0 = arith.constant 0 : i32
    %2 = arith.cmpi ne, %1, %c0_i32_0 : i32
    scf.if %2 {
      %c0_14 = arith.constant 0 : index
      %c0_15 = arith.constant 0 : index
      %17 = vector.load %arg4[%c0_14, %c0_15] : memref<128x128xbf16, #tpu.memory_space<vmem>>, vector<128x128xbf16>
      %18 = arith.extf %17 : vector<128x128xbf16> to vector<128x128xf32>
      %c0_16 = arith.constant 0 : index
      %c0_17 = arith.constant 0 : index
      %19 = vector.load %arg5[%c0_16, %c0_17] : memref<128x128xbf16, #tpu.memory_space<vmem>>, vector<128x128xbf16>
      %20 = arith.extf %19 : vector<128x128xbf16> to vector<128x128xf32>
      %c0_18 = arith.constant 0 : index
      %c0_19 = arith.constant 0 : index
      %c0_20 = arith.constant 0 : index
      %21 = vector.load %arg6[%c0_18, %c0_19, %c0_20] : memref<1x128x128xbf16, #tpu.memory_space<vmem>>, vector<1x128x128xbf16>
      %22 = vector.shape_cast %21 : vector<1x128x128xbf16> to vector<128x128xbf16>
      %23 = arith.extf %22 : vector<128x128xbf16> to vector<128x128xf32>
      %24 = arith.mulf %20, %23 : vector<128x128xf32>
      %25 = arith.addf %18, %24 : vector<128x128xf32>
      %26 = arith.truncf %25 : vector<128x128xf32> to vector<128x128xbf16>
      %c0_21 = arith.constant 0 : index
      %c0_22 = arith.constant 0 : index
      %27 = vector.load %arg11[%c0_21, %c0_22] : memref<128x128xbf16, #tpu.memory_space<vmem>>, vector<128x128xbf16>
      tpu.vector_store %arg11[%c0_21, %c0_22], %26 {strides = array<i32>} : memref<128x128xbf16, #tpu.memory_space<vmem>>, vector<128x128xbf16>,
    } else {
    }
    %c0 = arith.constant 0 : index
    %c0_1 = arith.constant 0 : index
    %3 = vector.load %arg3[%c0, %c0_1] : memref<16x128xbf16, #tpu.memory_space<vmem>>, vector<16x128xbf16>
    %c0_2 = arith.constant 0 : index
    %c0_3 = arith.constant 0 : index
    %4 = vector.load %arg11[%c0_2, %c0_3] : memref<128x128xbf16, #tpu.memory_space<vmem>>, vector<128x128xbf16>
    %cst = arith.constant dense<0.000000e+00> : vector<16x128xf32>
    %5 = tpu.matmul %3, %4, %cst {dimension_numbers = #tpu.dot_dimension_numbers<[1], [0], [0], [1], [0, 0, 1, 1], [], []>} : vector<16x128xbf16>, vector<128x128xbf16>, vector<16x128xf32> -> vector<16x128xf32>
    %c0_4 = arith.constant 0 : index
    %c0_5 = arith.constant 0 : index
    %6 = vector.load %arg7[%c0_4, %c0_5] : memref<1x128xf32, #tpu.memory_space<vmem>>, vector<1x128xf32>
    %c0_6 = arith.constant 0 : index
    %c0_7 = arith.constant 0 : index
    %7 = vector.load %arg8[%c0_6, %c0_7] : memref<1x128xf32, #tpu.memory_space<vmem>>, vector<1x128xf32>
    %c0_8 = arith.constant 0 : index
    %c0_9 = arith.constant 0 : index
    %c0_10 = arith.constant 0 : index
    %8 = vector.load %arg9[%c0_8, %c0_9, %c0_10] : memref<1x1x128xf32, #tpu.memory_space<vmem>>, vector<1x1x128xf32>
    %9 = vector.shape_cast %8 : vector<1x1x128xf32> to vector<1x128xf32>
    %10 = arith.mulf %7, %9 : vector<1x128xf32>
    %11 = arith.addf %6, %10 : vector<1x128xf32>
    %12 = vector.broadcast %11 : vector<1x128xf32> to vector<16x128xf32>
    %13 = arith.addf %5, %12 : vector<16x128xf32>
    %c0_11 = arith.constant 0 : index
    %c0_12 = arith.constant 0 : index
    %c0_13 = arith.constant 0 : index
    %14 = vector.load %arg10[%c0_11, %c0_12, %c0_13] : memref<1x16x128xf32, #tpu.memory_space<vmem>>, vector<1x16x128xf32>
    %15 = vector.shape_cast %14 : vector<1x16x128xf32> to vector<16x128xf32>
    %16 = vector.shape_cast %13 : vector<16x128xf32> to vector<1x16x128xf32>
    tpu.vector_store %arg10[%c0_11, %c0_12, %c0_13], %16 {strides = array<i32>} : memref<1x16x128xf32, #tpu.memory_space<vmem>>, vector<1x16x128xf32>,
    return
  }
  func.func @transform_0(%arg0: i32, %arg1: i32, %arg2: i32) -> (i32, i32) {
    %c0_i32 = arith.constant 0 : i32
    %c0_i32_0 = arith.constant 0 : i32
    return %arg2, %c0_i32 : i32, i32
  }
  func.func @transform_1(%arg0: i32, %arg1: i32, %arg2: i32) -> (i32, i32) {
    %c0_i32 = arith.constant 0 : i32
    %c0_i32_0 = arith.constant 0 : i32
    return %c0_i32, %arg1 : i32, i32
  }
  func.func @transform_2(%arg0: i32, %arg1: i32, %arg2: i32) -> (i32, i32) {
    %c0_i32 = arith.constant 0 : i32
    %c0_i32_0 = arith.constant 0 : i32
    return %c0_i32, %arg1 : i32, i32
  }
  func.func @transform_3(%arg0: i32, %arg1: i32, %arg2: i32) -> (i32, i32, i32) {
    %c0_i32 = arith.constant 0 : i32
    %c0_i32_0 = arith.constant 0 : i32
    return %arg0, %c0_i32, %arg1 : i32, i32, i32
  }
  func.func @transform_4(%arg0: i32, %arg1: i32, %arg2: i32) -> (i32, i32) {
    %c0_i32 = arith.constant 0 : i32
    %c0_i32_0 = arith.constant 0 : i32
    return %c0_i32, %arg1 : i32, i32
  }
  func.func @transform_5(%arg0: i32, %arg1: i32, %arg2: i32) -> (i32, i32) {
    %c0_i32 = arith.constant 0 : i32
    %c0_i32_0 = arith.constant 0 : i32
    return %c0_i32, %arg1 : i32, i32
  }
  func.func @transform_6(%arg0: i32, %arg1: i32, %arg2: i32) -> (i32, i32, i32) {
    %c0_i32 = arith.constant 0 : i32
    %c0_i32_0 = arith.constant 0 : i32
    return %arg0, %c0_i32, %arg1 : i32, i32, i32
  }
  func.func @transform_7(%arg0: i32, %arg1: i32, %arg2: i32) -> (i32, i32, i32) {
    %c0_i32 = arith.constant 0 : i32
    return %arg0, %arg2, %arg1 : i32, i32, i32
  }
}

</mosaic_0001>

<llo_original>
// kernel: tpu_custom_call.1
$region0: #{tpu_custom_call.1}
  #allocation0 [shape = 'u32[]', space=smem, size = 0x4, offset = 0x4, fixed_abs, tag = 'smem constant byte address 0x4 - core index']
  #allocation1 [shape = 'u32[72,128]{1,0:T(1,128)}', space=vmem, size = 0x9000, scoped, tag = 'internal scratch']
  #allocation2 [shape = 'bf16[128,128]{1,0:T(8,128)(2,1)}', space=vmem, size = 0x8000, scoped, tag = 'scratch operand']
  %s0 = inlined_call_operand.hbm [shape: bf16[16,128], index: 0, kind: input, shape index: {}]
  %s1 = inlined_call_operand.hbm [shape: bf16[128,128], index: 1, kind: input, shape index: {}]
  %s2 = inlined_call_operand.hbm [shape: bf16[128,128], index: 2, kind: input, shape index: {}]
  %s3 = inlined_call_operand.hbm [shape: bf16[1,128,128], index: 3, kind: input, shape index: {}]
  %s4 = inlined_call_operand.vmem [shape: f32[1,128], index: 4, kind: input, shape index: {}]
  %s5 = inlined_call_operand.vmem [shape: f32[1,128], index: 5, kind: input, shape index: {}]
  %s6 = inlined_call_operand.vmem [shape: f32[1,1,128], index: 6, kind: input, shape index: {}]
  %s7 = inlined_call_operand.hbm [shape: f32[1,16,128], index: 7, kind: output, shape index: {}]
  %s8 = sld [smem:[#allocation0]]
  $region58: #{tpu_custom_call.1} parent=0
    _
  %s10 = ssub.s32 1, %s8
  %s11 = scalar_select 0, %s10, %s8
  $region1: #{tpu_custom_call.1} parent=0
    #allocation3 [shape = 'u8[4096]{0}', space=vmem, size = 0x1000, scoped, tag = 'input window, operand 0, single buffered']
    #allocation4 [shape = 's32[1]{0}', space=sflag, size = 0x4, scoped, tag = 'scoped memory for tpu_custom_call.1']
    #allocation5 [shape = 's32[1]{0}', space=sflag, size = 0x4, scoped, tag = 'scoped memory for tpu_custom_call.1']
    #allocation6 [shape = 'u8[32768]{0}', space=vmem, size = 0x8000, scoped, tag = 'input window, operand 1, single buffered']
    #allocation7 [shape = 's32[1]{0}', space=sflag, size = 0x4, scoped, tag = 'scoped memory for tpu_custom_call.1']
    #allocation8 [shape = 'u8[32768]{0}', space=vmem, size = 0x8000, scoped, tag = 'input window, operand 2, single buffered']
    #allocation9 [shape = 'u8[32768]{0}', space=vmem, size = 0x8000, scoped, tag = 'input window, operand 3, single buffered']
    #allocation10 [shape = 's32[1]{0}', space=sflag, size = 0x4, scoped, tag = 'scoped memory for tpu_custom_call.1']
    #allocation11 [shape = 'u8[8192]{0}', space=vmem, size = 0x2000, scoped, tag = 'output window, operand 0, single buffered']
    %12 = vsyncpa [#allocation4], 0
    %13 = vsyncpa [#allocation7], 0
    %14 = vsyncpa [#allocation10], 0
    %15 = vsyncpa [#allocation5], 0
    // Predicated region
    $region2: #{tpu_custom_call.1} parent=1 // pred_check
      _
    $region3: #{tpu_custom_call.1} parent=1 // pred_check_branch
      %17 = sbr.rel (0) target = $region5
    $region4: #{tpu_custom_call.1} parent=1 // pred_region
      %19 = vsyncadd [#allocation4], 0
      %s20 = sshll.u32 %s0, 4
      %s21 = int_to_ptr.hbm [resolvable:$true] %s20
      %s22 = sshll.u32 [#allocation3], 4
      %s23 = int_to_ptr.vmem [resolvable:$true] %s22
      %28 = dma.hbm_to_vmem [thread:$0]  %s21, 128, %s23, [#allocation4], 64, 64, 4
    $region5: #{tpu_custom_call.1} parent=1 // pred_fallthru
      _
    // Predicated region
    $region6: #{tpu_custom_call.1} parent=1 // pred_check
      _
    $region7: #{tpu_custom_call.1} parent=1 // pred_check_branch
      %30 = sbr.rel (0) target = $region9
    $region8: #{tpu_custom_call.1} parent=1 // pred_region
      %32 = vsyncadd [#allocation7], 0
      %s33 = sshll.u32 %s1, 4
      %s34 = int_to_ptr.hbm [resolvable:$true] %s33
      %s35 = sshll.u32 [#allocation6], 4
      %s36 = int_to_ptr.vmem [resolvable:$true] %s35
      %41 = dma.hbm_to_vmem [thread:$0]  %s34, 1024, %s36, [#allocation7], 64, 64, 4
    $region9: #{tpu_custom_call.1} parent=1 // pred_fallthru
      _
    // Predicated region
    $region10: #{tpu_custom_call.1} parent=1 // pred_check
      _
    $region11: #{tpu_custom_call.1} parent=1 // pred_check_branch
      %43 = sbr.rel (0) target = $region13
    $region12: #{tpu_custom_call.1} parent=1 // pred_region
      %45 = vsyncadd [#allocation7], 0
      %s46 = sshll.u32 %s2, 4
      %s47 = int_to_ptr.hbm [resolvable:$true] %s46
      %s48 = sshll.u32 [#allocation8], 4
      %s49 = int_to_ptr.vmem [resolvable:$true] %s48
      %54 = dma.hbm_to_vmem [thread:$0]  %s47, 1024, %s49, [#allocation7], 64, 64, 4
    $region13: #{tpu_custom_call.1} parent=1 // pred_fallthru
      _
    // Predicated region
    $region14: #{tpu_custom_call.1} parent=1 // pred_check
      _
    $region15: #{tpu_custom_call.1} parent=1 // pred_check_branch
      %56 = sbr.rel (0) target = $region17
    $region16: #{tpu_custom_call.1} parent=1 // pred_region
      %58 = vsyncadd [#allocation10], 0
      %s59 = sshll.u32 %s3, 4
      %s60 = int_to_ptr.hbm [resolvable:$true] %s59
      %s61 = sshll.u32 [#allocation9], 4
      %s62 = int_to_ptr.vmem [resolvable:$true] %s61
      %67 = dma.hbm_to_vmem [thread:$0]  %s60, 1024, %s62, [#allocation10], 64, 64, 4
    $region17: #{tpu_custom_call.1} parent=1 // pred_fallthru
      _
    // Predicated region
    $region18: #{tpu_custom_call.1} parent=1 // pred_check
      _
    $region19: #{tpu_custom_call.1} parent=1 // pred_check_branch
      %69 = sbr.rel (0) target = $region21
    $region20: #{tpu_custom_call.1} parent=1 // pred_region
      _
    $region21: #{tpu_custom_call.1} parent=1 // pred_fallthru
      _
    // Predicated region
    $region22: #{tpu_custom_call.1} parent=1 // pred_check
      _
    $region23: #{tpu_custom_call.1} parent=1 // pred_check_branch
      %71 = sbr.rel (0) target = $region25
    $region24: #{tpu_custom_call.1} parent=1 // pred_region
      _
    $region25: #{tpu_custom_call.1} parent=1 // pred_fallthru
      _
    // Predicated region
    $region26: #{tpu_custom_call.1} parent=1 // pred_check
      _
    $region27: #{tpu_custom_call.1} parent=1 // pred_check_branch
      %73 = sbr.rel (0) target = $region29
    $region28: #{tpu_custom_call.1} parent=1 // pred_region
      _
    $region29: #{tpu_custom_call.1} parent=1 // pred_fallthru
      _
    // Predicated region
    $region30: #{tpu_custom_call.1} parent=1 // pred_check
      _
    $region31: #{tpu_custom_call.1} parent=1 // pred_check_branch
      %75 = sbr.rel (0) target = $region33
    $region32: #{tpu_custom_call.1} parent=1 // pred_region
      %77 = dma.done [#allocation4], 128
    $region33: #{tpu_custom_call.1} parent=1 // pred_fallthru
      _
    // Predicated region
    $region34: #{tpu_custom_call.1} parent=1 // pred_check
      _
    $region35: #{tpu_custom_call.1} parent=1 // pred_check_branch
      %79 = sbr.rel (0) target = $region37
    $region36: #{tpu_custom_call.1} parent=1 // pred_region
      %81 = dma.done [#allocation7], 1024
    $region37: #{tpu_custom_call.1} parent=1 // pred_fallthru
      _
    // Predicated region
    $region38: #{tpu_custom_call.1} parent=1 // pred_check
      _
    $region39: #{tpu_custom_call.1} parent=1 // pred_check_branch
      %83 = sbr.rel (0) target = $region41
    $region40: #{tpu_custom_call.1} parent=1 // pred_region
      %85 = dma.done [#allocation7], 1024
    $region41: #{tpu_custom_call.1} parent=1 // pred_fallthru
      _
    // Predicated region
    $region42: #{tpu_custom_call.1} parent=1 // pred_check
      _
    $region43: #{tpu_custom_call.1} parent=1 // pred_check_branch
      %87 = sbr.rel (0) target = $region45
    $region44: #{tpu_custom_call.1} parent=1 // pred_region
      %89 = dma.done [#allocation10], 1024
    $region45: #{tpu_custom_call.1} parent=1 // pred_fallthru
      _
    %p90 = scmp.eq.s32.totalorder 0, 0
    // Predicated region
    $region46: #{tpu_custom_call.1} parent=1 // pred_check
      %p91 = pneg %p90
    $region47: #{tpu_custom_call.1} parent=1 // pred_check_branch
      %93 = sbr.rel (%p91) target = $region49
    $region48: #{tpu_custom_call.1} parent=1 // pred_region
      %v94 = vld [vmem:[#allocation6] sm:$0xf]
      %v95 = vld [vmem:[#allocation6 + $0x4] sm:$0xf]
      %v96 = vld [vmem:[#allocation6 + $0x8] sm:$0xf]
      %v97 = vld [vmem:[#allocation6 + $0xc] sm:$0xf]
      %v98 = vld [vmem:[#allocation6 + $0x10] sm:$0xf]
      %v99 = vld [vmem:[#allocation6 + $0x14] sm:$0xf]
      %v100 = vld [vmem:[#allocation6 + $0x18] sm:$0xf]
      %v101 = vld [vmem:[#allocation6 + $0x1c] sm:$0xf]
      %v102 = vld [vmem:[#allocation6 + $0x20] sm:$0xf]
      %v103 = vld [vmem:[#allocation6 + $0x24] sm:$0xf]
      %v104 = vld [vmem:[#allocation6 + $0x28] sm:$0xf]
      %v105 = vld [vmem:[#allocation6 + $0x2c] sm:$0xf]
      %v106 = vld [vmem:[#allocation6 + $0x30] sm:$0xf]
      %v107 = vld [vmem:[#allocation6 + $0x34] sm:$0xf]
      %v108 = vld [vmem:[#allocation6 + $0x38] sm:$0xf]
      %v109 = vld [vmem:[#allocation6 + $0x3c] sm:$0xf]
      %v110 = vunpack.c.l.bf16 %v94
      %v111 = vunpack.c.l.bf16 %v95
      %v112 = vunpack.c.l.bf16 %v96
      %v113 = vunpack.c.l.bf16 %v97
      %v114 = vunpack.c.l.bf16 %v98
      %v115 = vunpack.c.l.bf16 %v99
      %v116 = vunpack.c.l.bf16 %v100
      %v117 = vunpack.c.l.bf16 %v101
      %v118 = vunpack.c.l.bf16 %v102
      %v119 = vunpack.c.l.bf16 %v103
      %v120 = vunpack.c.l.bf16 %v104
      %v121 = vunpack.c.l.bf16 %v105
      %v122 = vunpack.c.l.bf16 %v106
      %v123 = vunpack.c.l.bf16 %v107
      %v124 = vunpack.c.l.bf16 %v108
      %v125 = vunpack.c.l.bf16 %v109
      %v126 = vld [vmem:[#allocation8] sm:$0xf]
      %v127 = vld [vmem:[#allocation8 + $0x4] sm:$0xf]
      %v128 = vld [vmem:[#allocation8 + $0x8] sm:$0xf]
      %v129 = vld [vmem:[#allocation8 + $0xc] sm:$0xf]
      %v130 = vld [vmem:[#allocation8 + $0x10] sm:$0xf]
      %v131 = vld [vmem:[#allocation8 + $0x14] sm:$0xf]
      %v132 = vld [vmem:[#allocation8 + $0x18] sm:$0xf]
      %v133 = vld [vmem:[#allocation8 + $0x1c] sm:$0xf]
      %v134 = vld [vmem:[#allocation8 + $0x20] sm:$0xf]
      %v135 = vld [vmem:[#allocation8 + $0x24] sm:$0xf]
      %v136 = vld [vmem:[#allocation8 + $0x28] sm:$0xf]
      %v137 = vld [vmem:[#allocation8 + $0x2c] sm:$0xf]
      %v138 = vld [vmem:[#allocation8 + $0x30] sm:$0xf]
      %v139 = vld [vmem:[#allocation8 + $0x34] sm:$0xf]
      %v140 = vld [vmem:[#allocation8 + $0x38] sm:$0xf]
      %v141 = vld [vmem:[#allocation8 + $0x3c] sm:$0xf]
      %v142 = vunpack.c.l.bf16 %v126
      %v143 = vunpack.c.l.bf16 %v127
      %v144 = vunpack.c.l.bf16 %v128
      %v145 = vunpack.c.l.bf16 %v129
      %v146 = vunpack.c.l.bf16 %v130
      %v147 = vunpack.c.l.bf16 %v131
      %v148 = vunpack.c.l.bf16 %v132
      %v149 = vunpack.c.l.bf16 %v133
      %v150 = vunpack.c.l.bf16 %v134
      %v151 = vunpack.c.l.bf16 %v135
      %v152 = vunpack.c.l.bf16 %v136
      %v153 = vunpack.c.l.bf16 %v137
      %v154 = vunpack.c.l.bf16 %v138
      %v155 = vunpack.c.l.bf16 %v139
      %v156 = vunpack.c.l.bf16 %v140
      %v157 = vunpack.c.l.bf16 %v141
      %v158 = vld [vmem:[#allocation9] sm:$0xf]
      %v159 = vld [vmem:[#allocation9 + $0x4] sm:$0xf]
      %v160 = vld [vmem:[#allocation9 + $0x8] sm:$0xf]
      %v161 = vld [vmem:[#allocation9 + $0xc] sm:$0xf]
      %v162 = vld [vmem:[#allocation9 + $0x10] sm:$0xf]
      %v163 = vld [vmem:[#allocation9 + $0x14] sm:$0xf]
      %v164 = vld [vmem:[#allocation9 + $0x18] sm:$0xf]
      %v165 = vld [vmem:[#allocation9 + $0x1c] sm:$0xf]
      %v166 = vld [vmem:[#allocation9 + $0x20] sm:$0xf]
      %v167 = vld [vmem:[#allocation9 + $0x24] sm:$0xf]
      %v168 = vld [vmem:[#allocation9 + $0x28] sm:$0xf]
      %v169 = vld [vmem:[#allocation9 + $0x2c] sm:$0xf]
      %v170 = vld [vmem:[#allocation9 + $0x30] sm:$0xf]
      %v171 = vld [vmem:[#allocation9 + $0x34] sm:$0xf]
      %v172 = vld [vmem:[#allocation9 + $0x38] sm:$0xf]
      %v173 = vld [vmem:[#allocation9 + $0x3c] sm:$0xf]
      %v174 = vunpack.c.l.bf16 %v158
      %v175 = vunpack.c.l.bf16 %v159
      %v176 = vunpack.c.l.bf16 %v160
      %v177 = vunpack.c.l.bf16 %v161
      %v178 = vunpack.c.l.bf16 %v162
      %v179 = vunpack.c.l.bf16 %v163
      %v180 = vunpack.c.l.bf16 %v164
      %v181 = vunpack.c.l.bf16 %v165
      %v182 = vunpack.c.l.bf16 %v166
      %v183 = vunpack.c.l.bf16 %v167
      %v184 = vunpack.c.l.bf16 %v168
      %v185 = vunpack.c.l.bf16 %v169
      %v186 = vunpack.c.l.bf16 %v170
      %v187 = vunpack.c.l.bf16 %v171
      %v188 = vunpack.c.l.bf16 %v172
      %v189 = vunpack.c.l.bf16 %v173
      %v190 = vmul.f32 %v142, %v174
      %v191 = vmul.f32 %v143, %v175
      %v192 = vmul.f32 %v144, %v176
      %v193 = vmul.f32 %v145, %v177
      %v194 = vmul.f32 %v146, %v178
      %v195 = vmul.f32 %v147, %v179
      %v196 = vmul.f32 %v148, %v180
      %v197 = vmul.f32 %v149, %v181
      %v198 = vmul.f32 %v150, %v182
      %v199 = vmul.f32 %v151, %v183
      %v200 = vmul.f32 %v152, %v184
      %v201 = vmul.f32 %v153, %v185
      %v202 = vmul.f32 %v154, %v186
      %v203 = vmul.f32 %v155, %v187
      %v204 = vmul.f32 %v156, %v188
      %v205 = vmul.f32 %v157, %v189
      %v206 = vadd.f32 %v110, %v190
      %v207 = vadd.f32 %v111, %v191
      %v208 = vadd.f32 %v112, %v192
      %v209 = vadd.f32 %v113, %v193
      %v210 = vadd.f32 %v114, %v194
      %v211 = vadd.f32 %v115, %v195
      %v212 = vadd.f32 %v116, %v196
      %v213 = vadd.f32 %v117, %v197
      %v214 = vadd.f32 %v118, %v198
      %v215 = vadd.f32 %v119, %v199
      %v216 = vadd.f32 %v120, %v200
      %v217 = vadd.f32 %v121, %v201
      %v218 = vadd.f32 %v122, %v202
      %v219 = vadd.f32 %v123, %v203
      %v220 = vadd.f32 %v124, %v204
      %v221 = vadd.f32 %v125, %v205
      %v222 = vpack.c.bf16 %v206, %v206
      %v223 = vpack.c.bf16 %v207, %v207
      %v224 = vpack.c.bf16 %v208, %v208
      %v225 = vpack.c.bf16 %v209, %v209
      %v226 = vpack.c.bf16 %v210, %v210
      %v227 = vpack.c.bf16 %v211, %v211
      %v228 = vpack.c.bf16 %v212, %v212
      %v229 = vpack.c.bf16 %v213, %v213
      %v230 = vpack.c.bf16 %v214, %v214
      %v231 = vpack.c.bf16 %v215, %v215
      %v232 = vpack.c.bf16 %v216, %v216
      %v233 = vpack.c.bf16 %v217, %v217
      %v234 = vpack.c.bf16 %v218, %v218
      %v235 = vpack.c.bf16 %v219, %v219
      %v236 = vpack.c.bf16 %v220, %v220
      %v237 = vpack.c.bf16 %v221, %v221
      %238 = vst [vmem:[#allocation2] sm:$0xf] %v222
      %239 = vst [vmem:[#allocation2 + $0x4] sm:$0xf] %v223
      %240 = vst [vmem:[#allocation2 + $0x8] sm:$0xf] %v224
      %241 = vst [vmem:[#allocation2 + $0xc] sm:$0xf] %v225
      %242 = vst [vmem:[#allocation2 + $0x10] sm:$0xf] %v226
      %243 = vst [vmem:[#allocation2 + $0x14] sm:$0xf] %v227
      %244 = vst [vmem:[#allocation2 + $0x18] sm:$0xf] %v228
      %245 = vst [vmem:[#allocation2 + $0x1c] sm:$0xf] %v229
      %246 = vst [vmem:[#allocation2 + $0x20] sm:$0xf] %v230
      %247 = vst [vmem:[#allocation2 + $0x24] sm:$0xf] %v231
      %248 = vst [vmem:[#allocation2 + $0x28] sm:$0xf] %v232
      %249 = vst [vmem:[#allocation2 + $0x2c] sm:$0xf] %v233
      %250 = vst [vmem:[#allocation2 + $0x30] sm:$0xf] %v234
      %251 = vst [vmem:[#allocation2 + $0x34] sm:$0xf] %v235
      %252 = vst [vmem:[#allocation2 + $0x38] sm:$0xf] %v236
      %253 = vst [vmem:[#allocation2 + $0x3c] sm:$0xf] %v237
    $region49: #{tpu_custom_call.1} parent=1 // pred_fallthru
      _
    %v254 = vld [vmem:[#allocation3] sm:$0xf]
    %v255 = vld [vmem:[#allocation3 + $0x4] sm:$0xf]
    %v256 = vld [vmem:[#allocation2] sm:$0xf]
    %v257 = vld [vmem:[#allocation2 + $0x4] sm:$0xf]
    %v258 = vld [vmem:[#allocation2 + $0x8] sm:$0xf]
    %v259 = vld [vmem:[#allocation2 + $0xc] sm:$0xf]
    %v260 = vld [vmem:[#allocation2 + $0x10] sm:$0xf]
    %v261 = vld [vmem:[#allocation2 + $0x14] sm:$0xf]
    %v262 = vld [vmem:[#allocation2 + $0x18] sm:$0xf]
    %v263 = vld [vmem:[#allocation2 + $0x1c] sm:$0xf]
    %v264 = vld [vmem:[#allocation2 + $0x20] sm:$0xf]
    %v265 = vld [vmem:[#allocation2 + $0x24] sm:$0xf]
    %v266 = vld [vmem:[#allocation2 + $0x28] sm:$0xf]
    %v267 = vld [vmem:[#allocation2 + $0x2c] sm:$0xf]
    %v268 = vld [vmem:[#allocation2 + $0x30] sm:$0xf]
    %v269 = vld [vmem:[#allocation2 + $0x34] sm:$0xf]
    %v270 = vld [vmem:[#allocation2 + $0x38] sm:$0xf]
    %v271 = vld [vmem:[#allocation2 + $0x3c] sm:$0xf]
    %v272 = vld [vmem:[%s4] sm:$0x1]
    %v273 = vld [vmem:[%s5] sm:$0x1]
    %v274 = vld [vmem:[%s6] sm:$0x1]
    %v275 = vmul.f32 %v273, %v274
    %v276 = vadd.f32 %v272, %v275
    %v278 = vperm.slane %v276, 0
    %v282 = vunpack.c.l.b16 %v254
    %v283 = vunpack.c.l.b16 %v255
    %v284 = vpack.c.b16 %v283, %v282
    %v302 = vunpack.c.l.b16 %v256
    %v303 = vunpack.c.l.b16 %v257
    %v304 = vunpack.c.l.b16 %v258
    %v305 = vunpack.c.l.b16 %v259
    %v306 = vunpack.c.l.b16 %v260
    %v307 = vunpack.c.l.b16 %v261
    %v308 = vunpack.c.l.b16 %v262
    %v309 = vunpack.c.l.b16 %v263
    %v310 = vunpack.c.l.b16 %v264
    %v311 = vunpack.c.l.b16 %v265
    %v312 = vunpack.c.l.b16 %v266
    %v313 = vunpack.c.l.b16 %v267
    %v314 = vunpack.c.l.b16 %v268
    %v315 = vunpack.c.l.b16 %v269
    %v316 = vunpack.c.l.b16 %v270
    %v317 = vunpack.c.l.b16 %v271
    %v318 = vpack.c.b16 %v303, %v302
    %v319 = vpack.c.b16 %v305, %v304
    %v320 = vpack.c.b16 %v307, %v306
    %v321 = vpack.c.b16 %v309, %v308
    %v322 = vpack.c.b16 %v311, %v310
    %v323 = vpack.c.b16 %v313, %v312
    %v324 = vpack.c.b16 %v315, %v314
    %v325 = vpack.c.b16 %v317, %v316
    %334 = vmatpush.bf16.msra.mxu0 %v325
    %335 = vmatpush.bf16.msra.mxu0 %v324
    %336 = vmatpush.bf16.msra.mxu0 %v323
    %337 = vmatpush.bf16.msra.mxu0 %v322
    %338 = vmatpush.bf16.msra.mxu0 %v321
    %339 = vmatpush.bf16.msra.mxu0 %v320
    %340 = vmatpush.bf16.msra.mxu0 %v319
    %341 = vmatpush.bf16.msra.mxu0 %v318
    %342 = vmatmul.bf16.gmra.mxu0 %v284
    %v343 = vpop.f32.mrf.mxu0
    %v344 = vadd.f32 %v278, %v343
    %v345 = vpop.f32.mrf.mxu0
    %v346 = vadd.f32 %v278, %v345
    %347 = vdwg.mxu0
    %348 = vst [vmem:[#allocation11] sm:$0xff] %v344
    %349 = vst [vmem:[#allocation11 + $0x8] sm:$0xff] %v346
    // Predicated region
    $region50: #{tpu_custom_call.1} parent=1 // pred_check
      _
    $region51: #{tpu_custom_call.1} parent=1 // pred_check_branch
      %351 = sbr.rel (0) target = $region53
    $region52: #{tpu_custom_call.1} parent=1 // pred_region
      %353 = vsyncadd [#allocation5], 0
      %s354 = sshll.u32 [#allocation11], 4
      %s355 = int_to_ptr.vmem [resolvable:$true] %s354
      %s356 = sshll.u32 %s7, 4
      %s357 = int_to_ptr.hbm [resolvable:$true] %s356
      %362 = dma.vmem_to_hbm [thread:$0]  %s355, 256, %s357, [#allocation5], 128, 128, 8
    $region53: #{tpu_custom_call.1} parent=1 // pred_fallthru
      _
    // Predicated region
    $region54: #{tpu_custom_call.1} parent=1 // pred_check
      _
    $region55: #{tpu_custom_call.1} parent=1 // pred_check_branch
      %364 = sbr.rel (0) target = $region57
    $region56: #{tpu_custom_call.1} parent=1 // pred_region
      %366 = dma.done [#allocation5], 256
    $region57: #{tpu_custom_call.1} parent=1 // pred_fallthru
      _
    %367 = vsyncpa [#allocation4], 1
    %368 = vsyncpa [#allocation7], 1
    %369 = vsyncpa [#allocation10], 1
    %370 = vsyncpa [#allocation5], 1

</llo_original>
